<compile_context>
chip_gen: v7x
topology: tpu7x:2x2x1
jax: 0.10.0
libtpu: 0.0.40
codegen_flags: <defaults>
</compile_context>

<pallas_src>
import jax
import jax.numpy as jnp
from jax.experimental import pallas as pl
from jax.experimental.pallas import tpu as pltpu


def _round_up(x, m):
    return ((x + m - 1) // m) * m


def critic_kernel(state_ref, action_ref,          # [TB, S], [TB, A]
                  ws_ref, bs_ref,                 # [S, 32], [1, 32]
                  wa_ref, ba_ref,                 # [A, 16], [1, 16]
                  w2s_ref, w2a_ref, b2_ref,       # [32,128], [16,128], [1,128]
                  w3_ref, b3_ref,                 # [128, 32], [1, 32]
                  w4_ref, b4_ref,                 # [1, 32],  [1, 1]
                  out_ref):                       # [1, 1, TB]
    f32 = jnp.float32

    # fcState / fcAction
    hs = jnp.dot(state_ref[...], ws_ref[...], preferred_element_type=f32) + bs_ref[...]
    hs = jnp.maximum(hs, 0.0)                                         # [TB, 32]
    ha = jnp.dot(action_ref[...], wa_ref[...], preferred_element_type=f32) + ba_ref[...]
    ha = jnp.maximum(ha, 0.0)                                         # [TB, 16]

    # fc2 with the concat fused away: cat(hs, ha) @ W2 == hs @ W2[:32] + ha @ W2[32:]
    h = (jnp.dot(hs, w2s_ref[...], preferred_element_type=f32)
         + jnp.dot(ha, w2a_ref[...], preferred_element_type=f32)
         + b2_ref[...])
    h = jnp.maximum(h, 0.0)                                           # [TB, 128]

    # fc3
    h = jnp.dot(h, w3_ref[...], preferred_element_type=f32) + b3_ref[...]
    h = jnp.maximum(h, 0.0)                                           # [TB, 32]

    # fc4 producing a lane-dense [1, TB] row directly: w4_row @ h.T
    # (the XLU transpose slot is idle; the M=1 MXU pass is negligible).
    qt = jnp.dot(w4_ref[...], h.T, preferred_element_type=f32) + b4_ref[...]  # [1, TB]
    out_ref[0] = qt.astype(out_ref.dtype)


def critic_forward(state, action, params, *, block_batch=2048):
    """Critic forward pass. Batch-tiled grid; all weights stay resident in VMEM."""
    B, S = state.shape
    A = action.shape[1]
    state = state.astype(jnp.float32)
    action = action.astype(jnp.float32)

    # Batch tile: multiple of 8 (sublane), capped at block_batch; keep >= 2 grid
    # steps when the batch is large enough so both v7x TensorCores get work.
    tb_cap = _round_up(max(block_batch, 8), 8)
    TB = min(tb_cap, _round_up(B, 8))
    if B >= 16:
        TB = min(TB, _round_up(pl.cdiv(B, 2), 8))
    G = pl.cdiv(B, TB)   # ragged last tile: padded input reads, rows independent

    const = lambda arr: pl.BlockSpec(arr.shape, lambda i: (0, 0))

    in_specs = [
        pl.BlockSpec((TB, S), lambda i: (i, 0)),       # state (batch-tiled)
        pl.BlockSpec((TB, A), lambda i: (i, 0)),       # action (batch-tiled)
        const(params["ws"]), const(params["bs"]),
        const(params["wa"]), const(params["ba"]),
        const(params["w2s"]), const(params["w2a"]), const(params["b2"]),
        const(params["w3"]), const(params["b3"]),
        const(params["w4_row"]), const(params["b4_11"]),
    ]
    # Lane-dense output: (G, 1, TB) with block (1, 1, TB).
    out_spec = pl.BlockSpec((1, 1, TB), lambda i: (i, 0, 0))

    n_params = sum(int(params[k].size) for k in
                   ("ws", "bs", "wa", "ba", "w2s", "w2a", "b2", "w3", "b3",
                    "w4_row", "b4_11"))
    flops = 2 * B * (S * 32 + A * 16 + 32 * 128 + 16 * 128 + 128 * 32 + 32)
    bytes_accessed = 4 * (B * (S + A) + B + n_params)

    out = pl.pallas_call(
        critic_kernel,
        out_shape=jax.ShapeDtypeStruct((G, 1, TB), jnp.float32),
        grid=(G,),
        in_specs=in_specs,
        out_specs=out_spec,
        compiler_params=pltpu.CompilerParams(
            dimension_semantics=("parallel",)),
        cost_estimate=pl.CostEstimate(
            flops=flops, transcendentals=0, bytes_accessed=bytes_accessed),
    )(state, action,
      params["ws"], params["bs"],
      params["wa"], params["ba"],
      params["w2s"], params["w2a"], params["b2"],
      params["w3"], params["b3"],
      params["w4_row"], params["b4_11"])

    # (G, 1, TB) -> (G*TB, 1), drop padded tail rows of the last tile.
    return out.reshape(-1, 1)[:B]


def init_critic_params(state_size, action_size, seed=0):
    """Deterministic PyTorch-Linear-style init (uniform +/- 1/sqrt(fan_in)).

    Weights stored as [in_features, out_features] (transposed vs. torch).
    fc2 is pre-split into its state-half / action-half so the kernel never
    needs to materialize the concatenation."""
    key = jax.random.PRNGKey(seed)

    def linear(key, fan_in, fan_out):
        kw, kb = jax.random.split(key)
        bound = 1.0 / jnp.sqrt(jnp.float32(fan_in))
        w = jax.random.uniform(kw, (fan_in, fan_out), jnp.float32, -bound, bound)
        b = jax.random.uniform(kb, (1, fan_out), jnp.float32, -bound, bound)
        return w, b

    k1, k2, k3, k4, k5 = jax.random.split(key, 5)
    ws, bs = linear(k1, state_size, 32)     # fcState
    wa, ba = linear(k2, action_size, 16)    # fcAction
    w2, b2 = linear(k3, 32 + 16, 128)       # fc2
    w3, b3 = linear(k4, 128, 32)            # fc3
    w4, b4 = linear(k5, 32, 1)              # fc4

    return {
        # kernel-path params
        "ws": ws, "bs": bs,
        "wa": wa, "ba": ba,
        "w2s": w2[:32, :], "w2a": w2[32:, :], "b2": b2,
        "w3": w3, "b3": b3,
        "w4_row": w4.T,                 # [1, 32]
        "b4_11": b4.reshape(1, 1),      # [1, 1]
        # originals for the pure-JAX reference
        "w2": w2, "w4": w4, "b4_full": b4,
    }


def critic_reference(state, action, p):
    """Pure-JAX reference mirroring the PyTorch forward (highest precision)."""
    P = jax.lax.Precision.HIGHEST
    xs = jax.nn.relu(jnp.dot(state, p["ws"], precision=P) + p["bs"])
    xa = jax.nn.relu(jnp.dot(action, p["wa"], precision=P) + p["ba"])
    x = jnp.concatenate([xs, xa], axis=1)
    x = jax.nn.relu(jnp.dot(x, p["w2"], precision=P) + p["b2"])
    x = jax.nn.relu(jnp.dot(x, p["w3"], precision=P) + p["b3"])
    return jnp.dot(x, p["w4"], precision=P) + p["b4_full"]


if __name__ == "__main__":
    state_size = 24
    action_size = 4
    params = init_critic_params(state_size, action_size, seed=0)

    key = jax.random.PRNGKey(0)

    # Small batch: single tile.
    batch = 8
    ks, ka = jax.random.split(key)
    state = jax.random.normal(ks, (batch, state_size), jnp.float32)
    action = jax.random.normal(ka, (batch, action_size), jnp.float32)

    q = critic_forward(state, action, params)
    jax.block_until_ready(q)
    q_ref = critic_reference(state, action, params)
    assert q.shape == (batch, 1), q.shape
    assert jnp.allclose(q, q_ref, atol=1e-3, rtol=1e-3), (q, q_ref)

    # Larger, non-tile-multiple batch: exercises multi-tile grid + ragged edge.
    batch2 = 200
    ks2, ka2 = jax.random.split(jax.random.PRNGKey(1))
    state2 = jax.random.normal(ks2, (batch2, state_size), jnp.float32)
    action2 = jax.random.normal(ka2, (batch2, action_size), jnp.float32)

    q2 = critic_forward(state2, action2, params)
    jax.block_until_ready(q2)
    q2_ref = critic_reference(state2, action2, params)
    assert q2.shape == (batch2, 1), q2.shape
    assert jnp.allclose(q2, q2_ref, atol=1e-3, rtol=1e-3)

    print("KERNEL_OK")
</pallas_src>

<mosaic_0001>
module attributes {stable_mosaic.version = 11 : i64} {
  func.func @critic_kernel(%arg0: i32, %arg1: memref<8x24xf32, #tpu.memory_space<vmem>>, %arg2: memref<8x4xf32, #tpu.memory_space<vmem>>, %arg3: memref<24x32xf32, #tpu.memory_space<vmem>>, %arg4: memref<1x32xf32, #tpu.memory_space<vmem>>, %arg5: memref<4x16xf32, #tpu.memory_space<vmem>>, %arg6: memref<1x16xf32, #tpu.memory_space<vmem>>, %arg7: memref<32x128xf32, #tpu.memory_space<vmem>>, %arg8: memref<16x128xf32, #tpu.memory_space<vmem>>, %arg9: memref<1x128xf32, #tpu.memory_space<vmem>>, %arg10: memref<128x32xf32, #tpu.memory_space<vmem>>, %arg11: memref<1x32xf32, #tpu.memory_space<vmem>>, %arg12: memref<1x32xf32, #tpu.memory_space<vmem>>, %arg13: memref<1x1xf32, #tpu.memory_space<vmem>>, %arg14: memref<1x1x8xf32, #tpu.memory_space<vmem>>) attributes {dimension_semantics = [#tpu.dimension_semantics<parallel>], iteration_bounds = array<i64: 1>, scalar_prefetch = 0 : i64, scratch_operands = 0 : i64, tpu.core_type = #tpu.core_type<tc>, window_params = [{transform_indices = @transform_0, window_bounds = array<i64: 8, 24>}, {transform_indices = @transform_1, window_bounds = array<i64: 8, 4>}, {pipeline_mode = #tpu.pipeline_mode<synchronous>, transform_indices = @transform_2, window_bounds = array<i64: 24, 32>}, {pipeline_mode = #tpu.pipeline_mode<synchronous>, transform_indices = @transform_3, window_bounds = array<i64: 1, 32>}, {pipeline_mode = #tpu.pipeline_mode<synchronous>, transform_indices = @transform_4, window_bounds = array<i64: 4, 16>}, {pipeline_mode = #tpu.pipeline_mode<synchronous>, transform_indices = @transform_5, window_bounds = array<i64: 1, 16>}, {pipeline_mode = #tpu.pipeline_mode<synchronous>, transform_indices = @transform_6, window_bounds = array<i64: 32, 128>}, {pipeline_mode = #tpu.pipeline_mode<synchronous>, transform_indices = @transform_7, window_bounds = array<i64: 16, 128>}, {pipeline_mode = #tpu.pipeline_mode<synchronous>, transform_indices = @transform_8, window_bounds = array<i64: 1, 128>}, {pipeline_mode = #tpu.pipeline_mode<synchronous>, transform_indices = @transform_9, window_bounds = array<i64: 128, 32>}, {pipeline_mode = #tpu.pipeline_mode<synchronous>, transform_indices = @transform_10, window_bounds = array<i64: 1, 32>}, {pipeline_mode = #tpu.pipeline_mode<synchronous>, transform_indices = @transform_11, window_bounds = array<i64: 1, 32>}, {pipeline_mode = #tpu.pipeline_mode<synchronous>, transform_indices = @transform_12, window_bounds = array<i64: 1, 1>}, {transform_indices = @transform_13, window_bounds = array<i64: 1, 1, 8>}]} {
    %c0 = arith.constant 0 : index
    %c0_0 = arith.constant 0 : index
    %0 = vector.load %arg1[%c0, %c0_0] : memref<8x24xf32, #tpu.memory_space<vmem>>, vector<8x24xf32>
    %c0_1 = arith.constant 0 : index
    %c0_2 = arith.constant 0 : index
    %1 = vector.load %arg3[%c0_1, %c0_2] : memref<24x32xf32, #tpu.memory_space<vmem>>, vector<24x32xf32>
    %cst = arith.constant dense<0.000000e+00> : vector<8x32xf32>
    %2 = tpu.matmul %0, %1, %cst {dimension_numbers = #tpu.dot_dimension_numbers<[1], [0], [0], [1], [0, 0, 1, 1], [], []>} : vector<8x24xf32>, vector<24x32xf32>, vector<8x32xf32> -> vector<8x32xf32>
    %c0_3 = arith.constant 0 : index
    %c0_4 = arith.constant 0 : index
    %3 = vector.load %arg4[%c0_3, %c0_4] : memref<1x32xf32, #tpu.memory_space<vmem>>, vector<1x32xf32>
    %4 = vector.broadcast %3 : vector<1x32xf32> to vector<8x32xf32>
    %5 = arith.addf %2, %4 : vector<8x32xf32>
    %cst_5 = arith.constant 0.000000e+00 : f32
    %6 = vector.broadcast %cst_5 : f32 to vector<8x32xf32>
    %7 = arith.maximumf %5, %6 : vector<8x32xf32>
    %c0_6 = arith.constant 0 : index
    %c0_7 = arith.constant 0 : index
    %8 = vector.load %arg2[%c0_6, %c0_7] : memref<8x4xf32, #tpu.memory_space<vmem>>, vector<8x4xf32>
    %c0_8 = arith.constant 0 : index
    %c0_9 = arith.constant 0 : index
    %9 = vector.load %arg5[%c0_8, %c0_9] : memref<4x16xf32, #tpu.memory_space<vmem>>, vector<4x16xf32>
    %cst_10 = arith.constant dense<0.000000e+00> : vector<8x16xf32>
    %10 = tpu.matmul %8, %9, %cst_10 {dimension_numbers = #tpu.dot_dimension_numbers<[1], [0], [0], [1], [0, 0, 1, 1], [], []>} : vector<8x4xf32>, vector<4x16xf32>, vector<8x16xf32> -> vector<8x16xf32>
    %c0_11 = arith.constant 0 : index
    %c0_12 = arith.constant 0 : index
    %11 = vector.load %arg6[%c0_11, %c0_12] : memref<1x16xf32, #tpu.memory_space<vmem>>, vector<1x16xf32>
    %12 = vector.broadcast %11 : vector<1x16xf32> to vector<8x16xf32>
    %13 = arith.addf %10, %12 : vector<8x16xf32>
    %cst_13 = arith.constant 0.000000e+00 : f32
    %14 = vector.broadcast %cst_13 : f32 to vector<8x16xf32>
    %15 = arith.maximumf %13, %14 : vector<8x16xf32>
    %c0_14 = arith.constant 0 : index
    %c0_15 = arith.constant 0 : index
    %16 = vector.load %arg7[%c0_14, %c0_15] : memref<32x128xf32, #tpu.memory_space<vmem>>, vector<32x128xf32>
    %cst_16 = arith.constant dense<0.000000e+00> : vector<8x128xf32>
    %17 = tpu.matmul %7, %16, %cst_16 {dimension_numbers = #tpu.dot_dimension_numbers<[1], [0], [0], [1], [0, 0, 1, 1], [], []>} : vector<8x32xf32>, vector<32x128xf32>, vector<8x128xf32> -> vector<8x128xf32>
    %c0_17 = arith.constant 0 : index
    %c0_18 = arith.constant 0 : index
    %18 = vector.load %arg8[%c0_17, %c0_18] : memref<16x128xf32, #tpu.memory_space<vmem>>, vector<16x128xf32>
    %cst_19 = arith.constant dense<0.000000e+00> : vector<8x128xf32>
    %19 = tpu.matmul %15, %18, %cst_19 {dimension_numbers = #tpu.dot_dimension_numbers<[1], [0], [0], [1], [0, 0, 1, 1], [], []>} : vector<8x16xf32>, vector<16x128xf32>, vector<8x128xf32> -> vector<8x128xf32>
    %20 = arith.addf %17, %19 : vector<8x128xf32>
    %c0_20 = arith.constant 0 : index
    %c0_21 = arith.constant 0 : index
    %21 = vector.load %arg9[%c0_20, %c0_21] : memref<1x128xf32, #tpu.memory_space<vmem>>, vector<1x128xf32>
    %22 = vector.broadcast %21 : vector<1x128xf32> to vector<8x128xf32>
    %23 = arith.addf %20, %22 : vector<8x128xf32>
    %cst_22 = arith.constant 0.000000e+00 : f32
    %24 = vector.broadcast %cst_22 : f32 to vector<8x128xf32>
    %25 = arith.maximumf %23, %24 : vector<8x128xf32>
    %c0_23 = arith.constant 0 : index
    %c0_24 = arith.constant 0 : index
    %26 = vector.load %arg10[%c0_23, %c0_24] : memref<128x32xf32, #tpu.memory_space<vmem>>, vector<128x32xf32>
    %cst_25 = arith.constant dense<0.000000e+00> : vector<8x32xf32>
    %27 = tpu.matmul %25, %26, %cst_25 {dimension_numbers = #tpu.dot_dimension_numbers<[1], [0], [0], [1], [0, 0, 1, 1], [], []>} : vector<8x128xf32>, vector<128x32xf32>, vector<8x32xf32> -> vector<8x32xf32>
    %c0_26 = arith.constant 0 : index
    %c0_27 = arith.constant 0 : index
    %28 = vector.load %arg11[%c0_26, %c0_27] : memref<1x32xf32, #tpu.memory_space<vmem>>, vector<1x32xf32>
    %29 = vector.broadcast %28 : vector<1x32xf32> to vector<8x32xf32>
    %30 = arith.addf %27, %29 : vector<8x32xf32>
    %cst_28 = arith.constant 0.000000e+00 : f32
    %31 = vector.broadcast %cst_28 : f32 to vector<8x32xf32>
    %32 = arith.maximumf %30, %31 : vector<8x32xf32>
    %c0_29 = arith.constant 0 : index
    %c0_30 = arith.constant 0 : index
    %33 = vector.load %arg12[%c0_29, %c0_30] : memref<1x32xf32, #tpu.memory_space<vmem>>, vector<1x32xf32>
    %34 = tpu.transpose %32, [1, 0] : vector<8x32xf32> -> vector<32x8xf32>
    %cst_31 = arith.constant dense<0.000000e+00> : vector<1x8xf32>
    %35 = tpu.matmul %33, %34, %cst_31 {dimension_numbers = #tpu.dot_dimension_numbers<[1], [0], [0], [1], [0, 0, 1, 1], [], []>} : vector<1x32xf32>, vector<32x8xf32>, vector<1x8xf32> -> vector<1x8xf32>
    %c0_32 = arith.constant 0 : index
    %c0_33 = arith.constant 0 : index
    %36 = vector.load %arg13[%c0_32, %c0_33] : memref<1x1xf32, #tpu.memory_space<vmem>>, vector<1x1xf32>
    %37 = vector.broadcast %36 : vector<1x1xf32> to vector<1x8xf32>
    %38 = arith.addf %35, %37 : vector<1x8xf32>
    %c0_34 = arith.constant 0 : index
    %c0_35 = arith.constant 0 : index
    %c0_36 = arith.constant 0 : index
    %39 = vector.load %arg14[%c0_34, %c0_35, %c0_36] : memref<1x1x8xf32, #tpu.memory_space<vmem>>, vector<1x1x8xf32>
    %40 = vector.shape_cast %39 : vector<1x1x8xf32> to vector<1x8xf32>
    %41 = vector.shape_cast %38 : vector<1x8xf32> to vector<1x1x8xf32>
    tpu.vector_store %arg14[%c0_34, %c0_35, %c0_36], %41 {strides = array<i32>} : memref<1x1x8xf32, #tpu.memory_space<vmem>>, vector<1x1x8xf32>,
    return
  }
  func.func @transform_0(%arg0: i32) -> (i32, i32) {
    %c0_i32 = arith.constant 0 : i32
    %c0_i32_0 = arith.constant 0 : i32
    return %arg0, %c0_i32 : i32, i32
  }
  func.func @transform_1(%arg0: i32) -> (i32, i32) {
    %c0_i32 = arith.constant 0 : i32
    %c0_i32_0 = arith.constant 0 : i32
    return %arg0, %c0_i32 : i32, i32
  }
  func.func @transform_2(%arg0: i32) -> (i32, i32) {
    %c0_i32 = arith.constant 0 : i32
    %c0_i32_0 = arith.constant 0 : i32
    %c0_i32_1 = arith.constant 0 : i32
    return %c0_i32, %c0_i32_0 : i32, i32
  }
  func.func @transform_3(%arg0: i32) -> (i32, i32) {
    %c0_i32 = arith.constant 0 : i32
    %c0_i32_0 = arith.constant 0 : i32
    %c0_i32_1 = arith.constant 0 : i32
    return %c0_i32, %c0_i32_0 : i32, i32
  }
  func.func @transform_4(%arg0: i32) -> (i32, i32) {
    %c0_i32 = arith.constant 0 : i32
    %c0_i32_0 = arith.constant 0 : i32
    %c0_i32_1 = arith.constant 0 : i32
    return %c0_i32, %c0_i32_0 : i32, i32
  }
  func.func @transform_5(%arg0: i32) -> (i32, i32) {
    %c0_i32 = arith.constant 0 : i32
    %c0_i32_0 = arith.constant 0 : i32
    %c0_i32_1 = arith.constant 0 : i32
    return %c0_i32, %c0_i32_0 : i32, i32
  }
  func.func @transform_6(%arg0: i32) -> (i32, i32) {
    %c0_i32 = arith.constant 0 : i32
    %c0_i32_0 = arith.constant 0 : i32
    %c0_i32_1 = arith.constant 0 : i32
    return %c0_i32, %c0_i32_0 : i32, i32
  }
  func.func @transform_7(%arg0: i32) -> (i32, i32) {
    %c0_i32 = arith.constant 0 : i32
    %c0_i32_0 = arith.constant 0 : i32
    %c0_i32_1 = arith.constant 0 : i32
    return %c0_i32, %c0_i32_0 : i32, i32
  }
  func.func @transform_8(%arg0: i32) -> (i32, i32) {
    %c0_i32 = arith.constant 0 : i32
    %c0_i32_0 = arith.constant 0 : i32
    %c0_i32_1 = arith.constant 0 : i32
    return %c0_i32, %c0_i32_0 : i32, i32
  }
  func.func @transform_9(%arg0: i32) -> (i32, i32) {
    %c0_i32 = arith.constant 0 : i32
    %c0_i32_0 = arith.constant 0 : i32
    %c0_i32_1 = arith.constant 0 : i32
    return %c0_i32, %c0_i32_0 : i32, i32
  }
  func.func @transform_10(%arg0: i32) -> (i32, i32) {
    %c0_i32 = arith.constant 0 : i32
    %c0_i32_0 = arith.constant 0 : i32
    %c0_i32_1 = arith.constant 0 : i32
    return %c0_i32, %c0_i32_0 : i32, i32
  }
  func.func @transform_11(%arg0: i32) -> (i32, i32) {
    %c0_i32 = arith.constant 0 : i32
    %c0_i32_0 = arith.constant 0 : i32
    %c0_i32_1 = arith.constant 0 : i32
    return %c0_i32, %c0_i32_0 : i32, i32
  }
  func.func @transform_12(%arg0: i32) -> (i32, i32) {
    %c0_i32 = arith.constant 0 : i32
    %c0_i32_0 = arith.constant 0 : i32
    %c0_i32_1 = arith.constant 0 : i32
    return %c0_i32, %c0_i32_0 : i32, i32
  }
  func.func @transform_13(%arg0: i32) -> (i32, i32, i32) {
    %c0_i32 = arith.constant 0 : i32
    %c0_i32_0 = arith.constant 0 : i32
    %c0_i32_1 = arith.constant 0 : i32
    return %arg0, %c0_i32, %c0_i32_0 : i32, i32, i32
  }
}

</mosaic_0001>

<llo_original>
// kernel: tpu_custom_call.1
$region0: #{tpu_custom_call.1}
  #allocation0 [shape = 'u32[]', space=smem, size = 0x4, offset = 0x4, fixed_abs, tag = 'smem constant byte address 0x4 - core index']
  #allocation1 [shape = 'u32[144,128]{1,0:T(1,128)}', space=vmem, size = 0x12000, scoped, tag = 'internal scratch']
  #allocation2 [shape = 'f32[1,1]{1,0:T(1,128)S(1)}', space=vmem, size = 0x200, scoped, tag = 'scoped memory for tpu_custom_call.1']
  %s0 = inlined_call_operand.vmem [shape: f32[8,24], index: 0, kind: input, shape index: {}]
  %s1 = inlined_call_operand.vmem [shape: f32[8,4], index: 1, kind: input, shape index: {}]
  %s2 = inlined_call_operand.vmem [shape: f32[24,32], index: 2, kind: input, shape index: {}]
  %s3 = inlined_call_operand.vmem [shape: f32[1,32], index: 3, kind: input, shape index: {}]
  %s4 = inlined_call_operand.vmem [shape: f32[4,16], index: 4, kind: input, shape index: {}]
  %s5 = inlined_call_operand.vmem [shape: f32[1,16], index: 5, kind: input, shape index: {}]
  %s6 = inlined_call_operand.vmem [shape: f32[32,128], index: 6, kind: input, shape index: {}]
  %s7 = inlined_call_operand.vmem [shape: f32[16,128], index: 7, kind: input, shape index: {}]
  %s8 = inlined_call_operand.vmem [shape: f32[1,128], index: 8, kind: input, shape index: {}]
  %s9 = inlined_call_operand.vmem [shape: f32[128,32], index: 9, kind: input, shape index: {}]
  %s10 = inlined_call_operand.vmem [shape: f32[1,32], index: 10, kind: input, shape index: {}]
  %s11 = inlined_call_operand.vmem [shape: f32[1,32], index: 11, kind: input, shape index: {}]
  %s12 = inlined_call_operand.<no memory space> [shape: f32[1,1], index: 12, kind: input, shape index: {}]
  %s13 = inlined_call_operand.hbm [shape: f32[1,1,8], index: 13, kind: output, shape index: {}]
  %s14 = sld [smem:[#allocation0]]
  $region62: #{tpu_custom_call.1} parent=0
    _
  %s16 = ssub.s32 1, %s14
  %s17 = scalar_select 0, %s16, %s14
  %v18 = vstv %s12
  %19 = vst [vmem:[#allocation2] sm:$0x1] %v18
  $region1: #{tpu_custom_call.1} parent=0
    #allocation3 [shape = 'u8[512]{0}', space=vmem, size = 0x400, scoped, tag = 'output window, operand 0, single buffered']
    #allocation4 [shape = 's32[1]{0}', space=sflag, size = 0x4, scoped, tag = 'scoped memory for tpu_custom_call.1']
    %20 = vsyncpa [#allocation4], 0
    // Predicated region
    $region2: #{tpu_custom_call.1} parent=1 // pred_check
      _
    $region3: #{tpu_custom_call.1} parent=1 // pred_check_branch
      %22 = sbr.rel (0) target = $region5
    $region4: #{tpu_custom_call.1} parent=1 // pred_region
      _
    $region5: #{tpu_custom_call.1} parent=1 // pred_fallthru
      _
    // Predicated region
    $region6: #{tpu_custom_call.1} parent=1 // pred_check
      _
    $region7: #{tpu_custom_call.1} parent=1 // pred_check_branch
      %24 = sbr.rel (0) target = $region9
    $region8: #{tpu_custom_call.1} parent=1 // pred_region
      _
    $region9: #{tpu_custom_call.1} parent=1 // pred_fallthru
      _
    // Predicated region
    $region10: #{tpu_custom_call.1} parent=1 // pred_check
      _
    $region11: #{tpu_custom_call.1} parent=1 // pred_check_branch
      %26 = sbr.rel (0) target = $region13
    $region12: #{tpu_custom_call.1} parent=1 // pred_region
      _
    $region13: #{tpu_custom_call.1} parent=1 // pred_fallthru
      _
    // Predicated region
    $region14: #{tpu_custom_call.1} parent=1 // pred_check
      _
    $region15: #{tpu_custom_call.1} parent=1 // pred_check_branch
      %28 = sbr.rel (0) target = $region17
    $region16: #{tpu_custom_call.1} parent=1 // pred_region
      _
    $region17: #{tpu_custom_call.1} parent=1 // pred_fallthru
      _
    // Predicated region
    $region18: #{tpu_custom_call.1} parent=1 // pred_check
      _
    $region19: #{tpu_custom_call.1} parent=1 // pred_check_branch
      %30 = sbr.rel (0) target = $region21
    $region20: #{tpu_custom_call.1} parent=1 // pred_region
      _
    $region21: #{tpu_custom_call.1} parent=1 // pred_fallthru
      _
    // Predicated region
    $region22: #{tpu_custom_call.1} parent=1 // pred_check
      _
    $region23: #{tpu_custom_call.1} parent=1 // pred_check_branch
      %32 = sbr.rel (0) target = $region25
    $region24: #{tpu_custom_call.1} parent=1 // pred_region
      _
    $region25: #{tpu_custom_call.1} parent=1 // pred_fallthru
      _
    // Predicated region
    $region26: #{tpu_custom_call.1} parent=1 // pred_check
      _
    $region27: #{tpu_custom_call.1} parent=1 // pred_check_branch
      %34 = sbr.rel (0) target = $region29
    $region28: #{tpu_custom_call.1} parent=1 // pred_region
      _
    $region29: #{tpu_custom_call.1} parent=1 // pred_fallthru
      _
    // Predicated region
    $region30: #{tpu_custom_call.1} parent=1 // pred_check
      _
    $region31: #{tpu_custom_call.1} parent=1 // pred_check_branch
      %36 = sbr.rel (0) target = $region33
    $region32: #{tpu_custom_call.1} parent=1 // pred_region
      _
    $region33: #{tpu_custom_call.1} parent=1 // pred_fallthru
      _
    // Predicated region
    $region34: #{tpu_custom_call.1} parent=1 // pred_check
      _
    $region35: #{tpu_custom_call.1} parent=1 // pred_check_branch
      %38 = sbr.rel (0) target = $region37
    $region36: #{tpu_custom_call.1} parent=1 // pred_region
      _
    $region37: #{tpu_custom_call.1} parent=1 // pred_fallthru
      _
    // Predicated region
    $region38: #{tpu_custom_call.1} parent=1 // pred_check
      _
    $region39: #{tpu_custom_call.1} parent=1 // pred_check_branch
      %40 = sbr.rel (0) target = $region41
    $region40: #{tpu_custom_call.1} parent=1 // pred_region
      _
    $region41: #{tpu_custom_call.1} parent=1 // pred_fallthru
      _
    // Predicated region
    $region42: #{tpu_custom_call.1} parent=1 // pred_check
      _
    $region43: #{tpu_custom_call.1} parent=1 // pred_check_branch
      %42 = sbr.rel (0) target = $region45
    $region44: #{tpu_custom_call.1} parent=1 // pred_region
      _
    $region45: #{tpu_custom_call.1} parent=1 // pred_fallthru
      _
    // Predicated region
    $region46: #{tpu_custom_call.1} parent=1 // pred_check
      _
    $region47: #{tpu_custom_call.1} parent=1 // pred_check_branch
      %44 = sbr.rel (0) target = $region49
    $region48: #{tpu_custom_call.1} parent=1 // pred_region
      _
    $region49: #{tpu_custom_call.1} parent=1 // pred_fallthru
      _
    // Predicated region
    $region50: #{tpu_custom_call.1} parent=1 // pred_check
      _
    $region51: #{tpu_custom_call.1} parent=1 // pred_check_branch
      %46 = sbr.rel (0) target = $region53
    $region52: #{tpu_custom_call.1} parent=1 // pred_region
      _
    $region53: #{tpu_custom_call.1} parent=1 // pred_fallthru
      _
    %v47 = vld [vmem:[%s0] sm:$0xff]
    %v48 = vld [vmem:[%s2] sm:$0xff]
    %v49 = vld [vmem:[%s2 + $0x8] sm:$0xff]
    %v50 = vld [vmem:[%s2 + $0x10] sm:$0xff]
    %v51 = vld [vmem:[%s3] sm:$0x1]
    %v53 = vlaneseq
    %v54 = vshrl.u32 %v53, 7
    %v55 = vsub.s32 0, %v54
    %v56 = vrot.slane %v51, %v55
    %vm58 = vcmask 195584
    %v60 = vsel %vm58, %v47, 0
    %62 = vmatprep.subr.mxu0 0.0
    %63 = vmatpush1.msra.mxu0 %v48
    %64 = vmatprep.subr.mxu0 0.0
    %65 = vmatpush1.msra.mxu0 %v49
    %66 = vmatprep.subr.mxu0 0.0
    %67 = vmatpush1.msra.mxu0 %v50
    %68 = vmatprep.subr.mxu0 0.0
    %69 = vmatpush1.msra.mxu0 0.0
    %70 = vmatprep.subr.mxu0 0.0
    %71 = vmatpush1.msra.mxu0 0.0
    %72 = vmatprep.subr.mxu0 0.0
    %73 = vmatpush1.msra.mxu0 0.0
    %74 = vmatprep.subr.mxu0 0.0
    %75 = vmatpush1.msra.mxu0 0.0
    %76 = vmatprep.subr.mxu0 0.0
    %77 = vmatpush1.msra.mxu0 0.0
    %78 = vmatprep.subr.mxu0 0.0
    %79 = vmatpush1.msra.mxu0 0.0
    %80 = vmatprep.subr.mxu0 0.0
    %81 = vmatpush1.msra.mxu0 0.0
    %82 = vmatprep.subr.mxu0 0.0
    %83 = vmatpush1.msra.mxu0 0.0
    %84 = vmatprep.subr.mxu0 0.0
    %85 = vmatpush1.msra.mxu0 0.0
    %86 = vmatprep.subr.mxu0 0.0
    %87 = vmatpush1.msra.mxu0 0.0
    %88 = vmatprep.subr.mxu0 0.0
    %89 = vmatpush1.msra.mxu0 0.0
    %90 = vmatprep.subr.mxu0 0.0
    %91 = vmatpush1.msra.mxu0 0.0
    %92 = vmatprep.subr.mxu0 0.0
    %93 = vmatpush1.msra.mxu0 0.0
    %94 = vmatprep.subr.mxu0 0.0
    %95 = vmatpush1.msra.mxu0 0.0
    %96 = vmatprep.subr.mxu0 0.0
    %97 = vmatpush1.msra.mxu0 0.0
    %98 = vmatprep.subr.mxu0 0.0
    %99 = vmatpush1.msra.mxu0 0.0
    %100 = vmatprep.subr.mxu0 0.0
    %101 = vmatpush1.msra.mxu0 0.0
    %102 = vmatprep.subr.mxu0 0.0
    %103 = vmatpush1.msra.mxu0 0.0
    %104 = vmatprep.subr.mxu0 0.0
    %105 = vmatpush1.msra.mxu0 0.0
    %106 = vmatprep.subr.mxu0 0.0
    %107 = vmatpush1.msra.mxu0 0.0
    %108 = vmatprep.subr.mxu0 0.0
    %109 = vmatpush1.msra.mxu0 0.0
    %110 = vmatprep.subr.mxu0 0.0
    %111 = vmatpush1.msra.mxu0 0.0
    %112 = vmatprep.subr.mxu0 0.0
    %113 = vmatpush1.msra.mxu0 0.0
    %114 = vmatprep.subr.mxu0 0.0
    %115 = vmatpush1.msra.mxu0 0.0
    %116 = vmatprep.subr.mxu0 0.0
    %117 = vmatpush1.msra.mxu0 0.0
    %118 = vmatprep.subr.mxu0 0.0
    %119 = vmatpush1.msra.mxu0 0.0
    %120 = vmatprep.subr.mxu0 0.0
    %121 = vmatpush1.msra.mxu0 0.0
    %122 = vmatprep.subr.mxu0 0.0
    %123 = vmatpush1.msra.mxu0 0.0
    %124 = vmatprep.subr.mxu0 0.0
    %125 = vmatpush1.msra.mxu0 0.0
    %126 = vmatprep.mubr.f32.mxu0 0.0
    %127 = vmatmul.mubr.f32.gmra.mrb[0].mxu0 %v60
    %v128 = vpop.f32.mrb[0].mxu0
    %v129 = vadd.f32 %v56, %v128
    %v130 = vpop.f32.mrb[0].mxu0
    %131 = vdwg.mxu0
    %v132 = vmax.f32 %v129, 0.0
    %v133 = vld [vmem:[%s1] sm:$0xff]
    %v134 = vld [vmem:[%s4] sm:$0xf]
    %v135 = vld [vmem:[%s5] sm:$0x1]
    %v137 = vlaneseq
    %v138 = vshrl.u32 %v137, 7
    %v139 = vsub.s32 0, %v138
    %v140 = vrot.slane %v135, %v139
    %vm142 = vcmask 31744
    %v144 = vsel %vm142, %v133, 0
    %vm146 = vcmask 1043456
    %v148 = vsel %vm146, %v134, 0
    %150 = vmatprep.subr.mxu0 0.0
    %151 = vmatpush1.msra.mxu0 %v148
    %152 = vmatprep.subr.mxu0 0.0
    %153 = vmatpush1.msra.mxu0 0.0
    %154 = vmatprep.subr.mxu0 0.0
    %155 = vmatpush1.msra.mxu0 0.0
    %156 = vmatprep.subr.mxu0 0.0
    %157 = vmatpush1.msra.mxu0 0.0
    %158 = vmatprep.subr.mxu0 0.0
    %159 = vmatpush1.msra.mxu0 0.0
    %160 = vmatprep.subr.mxu0 0.0
    %161 = vmatpush1.msra.mxu0 0.0
    %162 = vmatprep.subr.mxu0 0.0
    %163 = vmatpush1.msra.mxu0 0.0
    %164 = vmatprep.subr.mxu0 0.0
    %165 = vmatpush1.msra.mxu0 0.0
    %166 = vmatprep.subr.mxu0 0.0
    %167 = vmatpush1.msra.mxu0 0.0
    %168 = vmatprep.subr.mxu0 0.0
    %169 = vmatpush1.msra.mxu0 0.0
    %170 = vmatprep.subr.mxu0 0.0
    %171 = vmatpush1.msra.mxu0 0.0
    %172 = vmatprep.subr.mxu0 0.0
    %173 = vmatpush1.msra.mxu0 0.0
    %174 = vmatprep.subr.mxu0 0.0
    %175 = vmatpush1.msra.mxu0 0.0
    %176 = vmatprep.subr.mxu0 0.0
    %177 = vmatpush1.msra.mxu0 0.0
    %178 = vmatprep.subr.mxu0 0.0
    %179 = vmatpush1.msra.mxu0 0.0
    %180 = vmatprep.subr.mxu0 0.0
    %181 = vmatpush1.msra.mxu0 0.0
    %182 = vmatprep.subr.mxu0 0.0
    %183 = vmatpush1.msra.mxu0 0.0
    %184 = vmatprep.subr.mxu0 0.0
    %185 = vmatpush1.msra.mxu0 0.0
    %186 = vmatprep.subr.mxu0 0.0
    %187 = vmatpush1.msra.mxu0 0.0
    %188 = vmatprep.subr.mxu0 0.0
    %189 = vmatpush1.msra.mxu0 0.0
    %190 = vmatprep.subr.mxu0 0.0
    %191 = vmatpush1.msra.mxu0 0.0
    %192 = vmatprep.subr.mxu0 0.0
    %193 = vmatpush1.msra.mxu0 0.0
    %194 = vmatprep.subr.mxu0 0.0
    %195 = vmatpush1.msra.mxu0 0.0
    %196 = vmatprep.subr.mxu0 0.0
    %197 = vmatpush1.msra.mxu0 0.0
    %198 = vmatprep.subr.mxu0 0.0
    %199 = vmatpush1.msra.mxu0 0.0
    %200 = vmatprep.subr.mxu0 0.0
    %201 = vmatpush1.msra.mxu0 0.0
    %202 = vmatprep.subr.mxu0 0.0
    %203 = vmatpush1.msra.mxu0 0.0
    %204 = vmatprep.subr.mxu0 0.0
    %205 = vmatpush1.msra.mxu0 0.0
    %206 = vmatprep.subr.mxu0 0.0
    %207 = vmatpush1.msra.mxu0 0.0
    %208 = vmatprep.subr.mxu0 0.0
    %209 = vmatpush1.msra.mxu0 0.0
    %210 = vmatprep.subr.mxu0 0.0
    %211 = vmatpush1.msra.mxu0 0.0
    %212 = vmatprep.subr.mxu0 0.0
    %213 = vmatpush1.msra.mxu0 0.0
    %214 = vmatprep.mubr.f32.mxu0 0.0
    %215 = vmatmul.mubr.f32.gmra.mrb[0].mxu0 %v144
    %v216 = vpop.f32.mrb[0].mxu0
    %v217 = vadd.f32 %v140, %v216
    %v218 = vpop.f32.mrb[0].mxu0
    %219 = vdwg.mxu0
    %v220 = vmax.f32 %v217, 0.0
    %v221 = vld [vmem:[%s6] sm:$0xff]
    %v222 = vld [vmem:[%s6 + $0x8] sm:$0xff]
    %v223 = vld [vmem:[%s6 + $0x10] sm:$0xff]
    %v224 = vld [vmem:[%s6 + $0x18] sm:$0xff]
    %v225 = vld [vmem:[%s7] sm:$0xff]
    %v226 = vld [vmem:[%s7 + $0x8] sm:$0xff]
    %vm227 = vcmask 130048
    %v229 = vsel %vm227, %v220, 0
    %231 = vmatprep.subr.mxu0 0.0
    %232 = vmatpush1.msra.mxu0 %v225
    %233 = vmatprep.subr.mxu0 0.0
    %234 = vmatpush1.msra.mxu0 %v226
    %235 = vmatprep.subr.mxu0 0.0
    %236 = vmatpush1.msra.mxu0 0.0
    %237 = vmatprep.subr.mxu0 0.0
    %238 = vmatpush1.msra.mxu0 0.0
    %239 = vmatprep.subr.mxu0 0.0
    %240 = vmatpush1.msra.mxu0 0.0
    %241 = vmatprep.subr.mxu0 0.0
    %242 = vmatpush1.msra.mxu0 0.0
    %243 = vmatprep.subr.mxu0 0.0
    %244 = vmatpush1.msra.mxu0 0.0
    %245 = vmatprep.subr.mxu0 0.0
    %246 = vmatpush1.msra.mxu0 0.0
    %247 = vmatprep.subr.mxu0 0.0
    %248 = vmatpush1.msra.mxu0 0.0
    %249 = vmatprep.subr.mxu0 0.0
    %250 = vmatpush1.msra.mxu0 0.0
    %251 = vmatprep.subr.mxu0 0.0
    %252 = vmatpush1.msra.mxu0 0.0
    %253 = vmatprep.subr.mxu0 0.0
    %254 = vmatpush1.msra.mxu0 0.0
    %255 = vmatprep.subr.mxu0 0.0
    %256 = vmatpush1.msra.mxu0 0.0
    %257 = vmatprep.subr.mxu0 0.0
    %258 = vmatpush1.msra.mxu0 0.0
    %259 = vmatprep.subr.mxu0 0.0
    %260 = vmatpush1.msra.mxu0 0.0
    %261 = vmatprep.subr.mxu0 0.0
    %262 = vmatpush1.msra.mxu0 0.0
    %263 = vmatprep.subr.mxu0 0.0
    %264 = vmatpush1.msra.mxu0 0.0
    %265 = vmatprep.subr.mxu0 0.0
    %266 = vmatpush1.msra.mxu0 0.0
    %267 = vmatprep.subr.mxu0 0.0
    %268 = vmatpush1.msra.mxu0 0.0
    %269 = vmatprep.subr.mxu0 0.0
    %270 = vmatpush1.msra.mxu0 0.0
    %271 = vmatprep.subr.mxu0 0.0
    %272 = vmatpush1.msra.mxu0 0.0
    %273 = vmatprep.subr.mxu0 0.0
    %274 = vmatpush1.msra.mxu0 0.0
    %275 = vmatprep.subr.mxu0 0.0
    %276 = vmatpush1.msra.mxu0 0.0
    %277 = vmatprep.subr.mxu0 0.0
    %278 = vmatpush1.msra.mxu0 0.0
    %279 = vmatprep.subr.mxu0 0.0
    %280 = vmatpush1.msra.mxu0 0.0
    %281 = vmatprep.subr.mxu0 0.0
    %282 = vmatpush1.msra.mxu0 0.0
    %283 = vmatprep.subr.mxu0 0.0
    %284 = vmatpush1.msra.mxu0 0.0
    %285 = vmatprep.subr.mxu0 0.0
    %286 = vmatpush1.msra.mxu0 0.0
    %287 = vmatprep.subr.mxu0 0.0
    %288 = vmatpush1.msra.mxu0 0.0
    %289 = vmatprep.subr.mxu0 0.0
    %290 = vmatpush1.msra.mxu0 0.0
    %291 = vmatprep.subr.mxu0 0.0
    %292 = vmatpush1.msra.mxu0 0.0
    %293 = vmatprep.subr.mxu0 0.0
    %294 = vmatpush1.msra.mxu0 0.0
    %295 = vmatprep.mubr.f32.mxu0 0.0
    %296 = vmatmul.mubr.f32.gmra.mrb[0].mxu0 %v229
    %v297 = vpop.f32.mrb[0].mxu0
    %v298 = vadd.f32 0.0, %v297
    %v299 = vpop.f32.mrb[0].mxu0
    %300 = vdwg.mxu0
    %vm301 = vcmask 261120
    %v303 = vsel %vm301, %v132, 0
    %305 = vmatprep.subr.mxu0 0.0
    %306 = vmatpush1.msra.mxu0 %v221
    %307 = vmatprep.subr.mxu0 0.0
    %308 = vmatpush1.msra.mxu0 %v222
    %309 = vmatprep.subr.mxu0 0.0
    %310 = vmatpush1.msra.mxu0 %v223
    %311 = vmatprep.subr.mxu0 0.0
    %312 = vmatpush1.msra.mxu0 %v224
    %313 = vmatprep.subr.mxu0 0.0
    %314 = vmatpush1.msra.mxu0 0.0
    %315 = vmatprep.subr.mxu0 0.0
    %316 = vmatpush1.msra.mxu0 0.0
    %317 = vmatprep.subr.mxu0 0.0
    %318 = vmatpush1.msra.mxu0 0.0
    %319 = vmatprep.subr.mxu0 0.0
    %320 = vmatpush1.msra.mxu0 0.0
    %321 = vmatprep.subr.mxu0 0.0
    %322 = vmatpush1.msra.mxu0 0.0
    %323 = vmatprep.subr.mxu0 0.0
    %324 = vmatpush1.msra.mxu0 0.0
    %325 = vmatprep.subr.mxu0 0.0
    %326 = vmatpush1.msra.mxu0 0.0
    %327 = vmatprep.subr.mxu0 0.0
    %328 = vmatpush1.msra.mxu0 0.0
    %329 = vmatprep.subr.mxu0 0.0
    %330 = vmatpush1.msra.mxu0 0.0
    %331 = vmatprep.subr.mxu0 0.0
    %332 = vmatpush1.msra.mxu0 0.0
    %333 = vmatprep.subr.mxu0 0.0
    %334 = vmatpush1.msra.mxu0 0.0
    %335 = vmatprep.subr.mxu0 0.0
    %336 = vmatpush1.msra.mxu0 0.0
    %337 = vmatprep.subr.mxu0 0.0
    %338 = vmatpush1.msra.mxu0 0.0
    %339 = vmatprep.subr.mxu0 0.0
    %340 = vmatpush1.msra.mxu0 0.0
    %341 = vmatprep.subr.mxu0 0.0
    %342 = vmatpush1.msra.mxu0 0.0
    %343 = vmatprep.subr.mxu0 0.0
    %344 = vmatpush1.msra.mxu0 0.0
    %345 = vmatprep.subr.mxu0 0.0
    %346 = vmatpush1.msra.mxu0 0.0
    %347 = vmatprep.subr.mxu0 0.0
    %348 = vmatpush1.msra.mxu0 0.0
    %349 = vmatprep.subr.mxu0 0.0
    %350 = vmatpush1.msra.mxu0 0.0
    %351 = vmatprep.subr.mxu0 0.0
    %352 = vmatpush1.msra.mxu0 0.0
    %353 = vmatprep.subr.mxu0 0.0
    %354 = vmatpush1.msra.mxu0 0.0
    %355 = vmatprep.subr.mxu0 0.0
    %356 = vmatpush1.msra.mxu0 0.0
    %357 = vmatprep.subr.mxu0 0.0
    %358 = vmatpush1.msra.mxu0 0.0
    %359 = vmatprep.subr.mxu0 0.0
    %360 = vmatpush1.msra.mxu0 0.0
    %361 = vmatprep.subr.mxu0 0.0
    %362 = vmatpush1.msra.mxu0 0.0
    %363 = vmatprep.subr.mxu0 0.0
    %364 = vmatpush1.msra.mxu0 0.0
    %365 = vmatprep.subr.mxu0 0.0
    %366 = vmatpush1.msra.mxu0 0.0
    %367 = vmatprep.subr.mxu0 0.0
    %368 = vmatpush1.msra.mxu0 0.0
    %369 = vmatprep.mubr.f32.mxu0 0.0
    %370 = vmatmul.mubr.f32.gmra.mrb[0].mxu0 %v303
    %v371 = vpop.f32.mrb[0].mxu0
    %v372 = vadd.f32 %v298, %v371
    %v373 = vpop.f32.mrb[0].mxu0
    %374 = vdwg.mxu0
    %v375 = vld [vmem:[%s8] sm:$0x1]
    %v377 = vlaneseq
    %v378 = vshrl.u32 %v377, 7
    %v379 = vsub.s32 0, %v378
    %v380 = vrot.slane %v375, %v379
    %v382 = vadd.f32 %v372, %v380
    %v383 = vmax.f32 %v382, 0.0
    %v384 = vld [vmem:[%s9] sm:$0xff]
    %v385 = vld [vmem:[%s9 + $0x8] sm:$0xff]
    %v386 = vld [vmem:[%s9 + $0x10] sm:$0xff]
    %v387 = vld [vmem:[%s9 + $0x18] sm:$0xff]
    %v388 = vld [vmem:[%s9 + $0x20] sm:$0xff]
    %v389 = vld [vmem:[%s9 + $0x28] sm:$0xff]
    %v390 = vld [vmem:[%s9 + $0x30] sm:$0xff]
    %v391 = vld [vmem:[%s9 + $0x38] sm:$0xff]
    %v392 = vld [vmem:[%s9 + $0x40] sm:$0xff]
    %v393 = vld [vmem:[%s9 + $0x48] sm:$0xff]
    %v394 = vld [vmem:[%s9 + $0x50] sm:$0xff]
    %v395 = vld [vmem:[%s9 + $0x58] sm:$0xff]
    %v396 = vld [vmem:[%s9 + $0x60] sm:$0xff]
    %v397 = vld [vmem:[%s9 + $0x68] sm:$0xff]
    %v398 = vld [vmem:[%s9 + $0x70] sm:$0xff]
    %v399 = vld [vmem:[%s9 + $0x78] sm:$0xff]
    %v400 = vld [vmem:[%s10] sm:$0x1]
    %v402 = vlaneseq
    %v403 = vshrl.u32 %v402, 7
    %v404 = vsub.s32 0, %v403
    %v405 = vrot.slane %v400, %v404
    %407 = vmatprep.subr.mxu0 0.0
    %408 = vmatpush1.msra.mxu0 %v384
    %409 = vmatprep.subr.mxu0 0.0
    %410 = vmatpush1.msra.mxu0 %v385
    %411 = vmatprep.subr.mxu0 0.0
    %412 = vmatpush1.msra.mxu0 %v386
    %413 = vmatprep.subr.mxu0 0.0
    %414 = vmatpush1.msra.mxu0 %v387
    %415 = vmatprep.subr.mxu0 0.0
    %416 = vmatpush1.msra.mxu0 %v388
    %417 = vmatprep.subr.mxu0 0.0
    %418 = vmatpush1.msra.mxu0 %v389
    %419 = vmatprep.subr.mxu0 0.0
    %420 = vmatpush1.msra.mxu0 %v390
    %421 = vmatprep.subr.mxu0 0.0
    %422 = vmatpush1.msra.mxu0 %v391
    %423 = vmatprep.subr.mxu0 0.0
    %424 = vmatpush1.msra.mxu0 %v392
    %425 = vmatprep.subr.mxu0 0.0
    %426 = vmatpush1.msra.mxu0 %v393
    %427 = vmatprep.subr.mxu0 0.0
    %428 = vmatpush1.msra.mxu0 %v394
    %429 = vmatprep.subr.mxu0 0.0
    %430 = vmatpush1.msra.mxu0 %v395
    %431 = vmatprep.subr.mxu0 0.0
    %432 = vmatpush1.msra.mxu0 %v396
    %433 = vmatprep.subr.mxu0 0.0
    %434 = vmatpush1.msra.mxu0 %v397
    %435 = vmatprep.subr.mxu0 0.0
    %436 = vmatpush1.msra.mxu0 %v398
    %437 = vmatprep.subr.mxu0 0.0
    %438 = vmatpush1.msra.mxu0 %v399
    %439 = vmatprep.subr.mxu0 0.0
    %440 = vmatpush1.msra.mxu0 0.0
    %441 = vmatprep.subr.mxu0 0.0
    %442 = vmatpush1.msra.mxu0 0.0
    %443 = vmatprep.subr.mxu0 0.0
    %444 = vmatpush1.msra.mxu0 0.0
    %445 = vmatprep.subr.mxu0 0.0
    %446 = vmatpush1.msra.mxu0 0.0
    %447 = vmatprep.subr.mxu0 0.0
    %448 = vmatpush1.msra.mxu0 0.0
    %449 = vmatprep.subr.mxu0 0.0
    %450 = vmatpush1.msra.mxu0 0.0
    %451 = vmatprep.subr.mxu0 0.0
    %452 = vmatpush1.msra.mxu0 0.0
    %453 = vmatprep.subr.mxu0 0.0
    %454 = vmatpush1.msra.mxu0 0.0
    %455 = vmatprep.subr.mxu0 0.0
    %456 = vmatpush1.msra.mxu0 0.0
    %457 = vmatprep.subr.mxu0 0.0
    %458 = vmatpush1.msra.mxu0 0.0
    %459 = vmatprep.subr.mxu0 0.0
    %460 = vmatpush1.msra.mxu0 0.0
    %461 = vmatprep.subr.mxu0 0.0
    %462 = vmatpush1.msra.mxu0 0.0
    %463 = vmatprep.subr.mxu0 0.0
    %464 = vmatpush1.msra.mxu0 0.0
    %465 = vmatprep.subr.mxu0 0.0
    %466 = vmatpush1.msra.mxu0 0.0
    %467 = vmatprep.subr.mxu0 0.0
    %468 = vmatpush1.msra.mxu0 0.0
    %469 = vmatprep.subr.mxu0 0.0
    %470 = vmatpush1.msra.mxu0 0.0
    %471 = vmatprep.mubr.f32.mxu0 0.0
    %472 = vmatmul.mubr.f32.gmra.mrb[0].mxu0 %v383
    %v473 = vpop.f32.mrb[0].mxu0
    %v474 = vadd.f32 %v405, %v473
    %v475 = vpop.f32.mrb[0].mxu0
    %476 = vdwg.mxu0
    %v477 = vmax.f32 %v474, 0.0
    %v478 = vld [vmem:[%s11] sm:$0x1]
    %v479 = vld [vmem:[#allocation2] sm:$0x1]
    %481 = vset.pattern.permute.xlu0 0
    %482 = vperm.xlu0 %481, %v479
    %v483 = vpop.permute.xlu0 %482
    %v485 = vlaneseq
    %v486 = vshrl.u32 %v485, 7
    %v487 = vsub.s32 0, %v486
    %v488 = vrot.slane %v483, %v487
    %v490 = vsel %vm301, %v478, 0
    %v493 = vsel %vm301, %v477, 0
    %495 = vmatprep.subr.mxu0 0.0
    %496 = vmatpush1.xpose.msra.mxu0 %v493
    %497 = vmatprep.subr.mxu0 0.0
    %498 = vmatpush1.xpose.msra.mxu0 0.0
    %499 = vmatprep.subr.mxu0 0.0
    %500 = vmatpush1.xpose.msra.mxu0 0.0
    %501 = vmatprep.subr.mxu0 0.0
    %502 = vmatpush1.xpose.msra.mxu0 0.0
    %503 = vmatprep.subr.mxu0 0.0
    %504 = vmatpush1.xpose.msra.mxu0 0.0
    %505 = vmatprep.subr.mxu0 0.0
    %506 = vmatpush1.xpose.msra.mxu0 0.0
    %507 = vmatprep.subr.mxu0 0.0
    %508 = vmatpush1.xpose.msra.mxu0 0.0
    %509 = vmatprep.subr.mxu0 0.0
    %510 = vmatpush1.xpose.msra.mxu0 0.0
    %511 = vmatprep.subr.mxu0 0.0
    %512 = vmatpush1.xpose.msra.mxu0 0.0
    %513 = vmatprep.subr.mxu0 0.0
    %514 = vmatpush1.xpose.msra.mxu0 0.0
    %515 = vmatprep.subr.mxu0 0.0
    %516 = vmatpush1.xpose.msra.mxu0 0.0
    %517 = vmatprep.subr.mxu0 0.0
    %518 = vmatpush1.xpose.msra.mxu0 0.0
    %519 = vmatprep.subr.mxu0 0.0
    %520 = vmatpush1.xpose.msra.mxu0 0.0
    %521 = vmatprep.subr.mxu0 0.0
    %522 = vmatpush1.xpose.msra.mxu0 0.0
    %523 = vmatprep.subr.mxu0 0.0
    %524 = vmatpush1.xpose.msra.mxu0 0.0
    %525 = vmatprep.subr.mxu0 0.0
    %526 = vmatpush1.xpose.msra.mxu0 0.0
    %527 = vmatprep.subr.mxu0 0.0
    %528 = vmatpush1.xpose.msra.mxu0 0.0
    %529 = vmatprep.subr.mxu0 0.0
    %530 = vmatpush1.xpose.msra.mxu0 0.0
    %531 = vmatprep.subr.mxu0 0.0
    %532 = vmatpush1.xpose.msra.mxu0 0.0
    %533 = vmatprep.subr.mxu0 0.0
    %534 = vmatpush1.xpose.msra.mxu0 0.0
    %535 = vmatprep.subr.mxu0 0.0
    %536 = vmatpush1.xpose.msra.mxu0 0.0
    %537 = vmatprep.subr.mxu0 0.0
    %538 = vmatpush1.xpose.msra.mxu0 0.0
    %539 = vmatprep.subr.mxu0 0.0
    %540 = vmatpush1.xpose.msra.mxu0 0.0
    %541 = vmatprep.subr.mxu0 0.0
    %542 = vmatpush1.xpose.msra.mxu0 0.0
    %543 = vmatprep.subr.mxu0 0.0
    %544 = vmatpush1.xpose.msra.mxu0 0.0
    %545 = vmatprep.subr.mxu0 0.0
    %546 = vmatpush1.xpose.msra.mxu0 0.0
    %547 = vmatprep.subr.mxu0 0.0
    %548 = vmatpush1.xpose.msra.mxu0 0.0
    %549 = vmatprep.subr.mxu0 0.0
    %550 = vmatpush1.xpose.msra.mxu0 0.0
    %551 = vmatprep.subr.mxu0 0.0
    %552 = vmatpush1.xpose.msra.mxu0 0.0
    %553 = vmatprep.subr.mxu0 0.0
    %554 = vmatpush1.xpose.msra.mxu0 0.0
    %555 = vmatprep.subr.mxu0 0.0
    %556 = vmatpush1.xpose.msra.mxu0 0.0
    %557 = vmatprep.subr.mxu0 0.0
    %558 = vmatpush1.xpose.msra.mxu0 0.0
    %559 = vmatprep.mubr.f32.mxu0 0.0
    %560 = vmatmul.mubr.f32.gmra.mrb[0].mxu0 %v490
    %v561 = vpop.f32.mrb[0].mxu0
    %v562 = vadd.f32 %v488, %v561
    %v563 = vpop.f32.mrb[0].mxu0
    %564 = vdwg.mxu0
    %vm565 = vcmask 57344
    %566 = vst.msk [vmem:[#allocation3] sm:$0x1] %vm565, %v562
    // Predicated region
    $region54: #{tpu_custom_call.1} parent=1 // pred_check
      _
    $region55: #{tpu_custom_call.1} parent=1 // pred_check_branch
      %568 = sbr.rel (0) target = $region57
    $region56: #{tpu_custom_call.1} parent=1 // pred_region
      %s570 = ssub.s32 16, 16
      %571 = vsyncadd [#allocation4], %s570
      %s573 = sshll.u32 [#allocation3], 4
      %s574 = int_to_ptr.vmem [resolvable:$true] %s573
      %576 = dma.vmem_to_hbm [thread:$0]  %s574, 16, %s13, [#allocation4]
    $region57: #{tpu_custom_call.1} parent=1 // pred_fallthru
      _
    // Predicated region
    $region58: #{tpu_custom_call.1} parent=1 // pred_check
      _
    $region59: #{tpu_custom_call.1} parent=1 // pred_check_branch
      %578 = sbr.rel (0) target = $region61
    $region60: #{tpu_custom_call.1} parent=1 // pred_region
      %579 = dma.done [#allocation4], 16
    $region61: #{tpu_custom_call.1} parent=1 // pred_fallthru
      _
    %580 = vsyncpa [#allocation4], 1

</llo_original>
